<compile_context>
chip_gen: v5e
topology: v5e:2x2
jax: 0.10.0
libtpu: 0.0.40
codegen_flags: <defaults>
</compile_context>

<pallas_src>
import functools

import jax
import jax.numpy as jnp
from jax.experimental import pallas as pl
from jax.experimental.pallas import tpu as pltpu

LANE = 128
SUBLANE = 8


def _round_up(x, m):
    return (x + m - 1) // m * m


@functools.lru_cache(maxsize=None)
def _vmem_limit_bytes():
    """Per-generation VMEM budget (<=32 MiB on v7x, 48 MiB on v5e/v6e)."""
    try:
        cap = int(pltpu.get_tpu_info().vmem_capacity_bytes)
    except Exception:
        cap = 0
    return min(48 * 1024 * 1024, cap // 2) if cap else 32 * 1024 * 1024


# ----------------------------------------------------------------------------
# Pallas kernel
# ----------------------------------------------------------------------------
def _conv_kernel(x_ref, w_ref, b_ref, *rest, KH, KW, stride, Th, Wo, Hph, nB,
                 Cin, relu, has_res, head, inv_hw, stack_taps):
    """Fused conv + BN bias + residual + ReLU (+ avgpool + Linear head).

    x_ref : (1, P*Hph, Wph, Cs)  bf16 phase-decomposed, spatially padded input
    w_ref : (KH*KW*Cin, Coutp)   bf16 (BN scale folded in, true-Cin K)
    b_ref : (1, Coutp)           f32 folded BN bias
    rest  : [res (1, Th*Wo, Coutp) bf16], [wfc (Coutp, Opp) bf16,
            bfc (1, Opp) f32], out, [pool scratch (1, Coutp) f32]
    """
    idx = 0
    r_ref = wfc_ref = bfc_ref = acc_ref = None
    if has_res:
        r_ref = rest[idx]
        idx += 1
    if head:
        wfc_ref, bfc_ref = rest[idx], rest[idx + 1]
        idx += 2
    o_ref = rest[idx]
    if head:
        acc_ref = rest[idx + 1]

    r_idx = pl.program_id(1)
    row0 = pl.multiple_of(r_idx * Th, Th)

    # Gather the KH*KW taps of this output-row tile.  Only the true input
    # channels are read, so padded lanes never enter the contraction.
    taps = []
    for di in range(KH):
        for dj in range(KW):
            p = (di % stride) * nB + (dj % stride)        # phase index
            h0 = p * Hph + di // stride
            w0 = dj // stride
            taps.append(x_ref[0, pl.ds(h0 + row0, Th), pl.ds(w0, Wo),
                              pl.ds(0, Cin)])             # (Th, Wo, Cin)

    coutp = w_ref.shape[-1]
    if stack_taps:
        # Single MXU contraction over K = KH*KW*Cin (fills the 256-deep MXU,
        # removes per-tap f32 adds / accumulator read-modify-writes).
        xk = taps[0] if len(taps) == 1 else jnp.concatenate(taps, axis=-1)
        xk = xk.reshape(Th * Wo, KH * KW * Cin)
        acc = jnp.dot(xk, w_ref[...], preferred_element_type=jnp.float32)
    else:
        # Fallback: per-tap dots accumulated in f32 (still true-Cin K).
        acc = jnp.zeros((Th * Wo, coutp), jnp.float32)
        for t, tap in enumerate(taps):
            acc = acc + jnp.dot(tap.reshape(Th * Wo, Cin),
                                w_ref[pl.ds(t * Cin, Cin), :],
                                preferred_element_type=jnp.float32)

    acc = acc + b_ref[...]                                # folded BN bias
    if has_res:
        acc = acc + r_ref[0].astype(jnp.float32)          # residual add
    if relu:
        acc = jnp.maximum(acc, 0.0)

    if head:
        # Fused AdaptiveAvgPool2d((1,1)) + Flatten + Linear.
        @pl.when(r_idx == 0)
        def _():
            acc_ref[...] = jnp.zeros_like(acc_ref)

        acc_ref[...] += jnp.sum(acc, axis=0, keepdims=True)

        @pl.when(r_idx == pl.num_programs(1) - 1)
        def _():
            pooled = (acc_ref[...] * inv_hw).astype(jnp.bfloat16)
            o_ref[0] = (jnp.dot(pooled, wfc_ref[...],
                                preferred_element_type=jnp.float32)
                        + bfc_ref[...])
    else:
        o_ref[0] = acc.astype(o_ref.dtype)                # lane-dense store


# ----------------------------------------------------------------------------
# Wrapper
# ----------------------------------------------------------------------------
def fold_bn(bn, eps=1e-5):
    scale = bn["gamma"] / jnp.sqrt(bn["var"] + eps)
    return scale, bn["beta"] - bn["mean"] * scale


def _make_phases(x, KH, KW, stride, padding, Ho, Wo):
    """Pad + phase-decompose NHWC x so every conv tap is a contiguous slice."""
    if padding:
        x = jnp.pad(x, ((0, 0), (padding, padding), (padding, padding), (0, 0)))
    nA, nB = min(stride, KH), min(stride, KW)
    Hph = Ho + (KH - 1) // stride
    Wph = Wo + (KW - 1) // stride
    phases = []
    for a in range(nA):
        for b in range(nB):
            ph = x[:, a::stride, b::stride, :][:, :Hph, :Wph, :]
            dh, dw = Hph - ph.shape[1], Wph - ph.shape[2]
            if dh or dw:
                ph = jnp.pad(ph, ((0, 0), (0, dh), (0, dw), (0, 0)))
            phases.append(ph)
    out = jnp.concatenate(phases, axis=1) if len(phases) > 1 else phases[0]
    return out, nA * nB, Hph, Wph, nB


def conv_bn_act(x, w_pt, bn, *, stride, padding, relu, residual=None,
                head=None):
    """x: (N, H, W, Cs) bf16 (Cs possibly 128-padded).  w_pt: (Cout,Cin,KH,KW).

    Returns (N, Ho, Wo, Coutp) bf16, or (N, output_size) f32 when head=(w, b).
    """
    N, H, W, Cs = x.shape
    Cout, Cin, KH, KW = w_pt.shape
    assert Cin <= Cs
    Ho = (H + 2 * padding - KH) // stride + 1
    Wo = (W + 2 * padding - KW) // stride + 1
    Coutp = _round_up(Cout, LANE)

    scale, bias = fold_bn(bn)
    w = (jnp.transpose(w_pt, (2, 3, 1, 0)) * scale).reshape(KH * KW * Cin, Cout)
    w = jnp.pad(w, ((0, 0), (0, Coutp - Cout))).astype(jnp.bfloat16)
    bvec = jnp.pad(bias, (0, Coutp - Cout)).astype(jnp.float32)[None, :]

    # Tiny-Cin convs (the 3-channel stem): stack taps once in the wrapper so
    # the kernel sees a plain 1x1 contraction (K = KH*KW*Cin <= 128).
    if KH * KW > 1 and Cin * KH * KW <= LANE:
        xp = x[..., :Cin]
        if padding:
            xp = jnp.pad(xp, ((0, 0), (padding, padding),
                              (padding, padding), (0, 0)))
        pieces = [xp[:, di:di + stride * (Ho - 1) + 1:stride,
                     dj:dj + stride * (Wo - 1) + 1:stride, :]
                  for di in range(KH) for dj in range(KW)]
        x = jnp.concatenate(pieces, axis=-1).astype(jnp.bfloat16)
        Cin = Cs = KH * KW * Cin
        KH = KW = stride = 1
        padding = 0

    x_ph, P, Hph, Wph, nB = _make_phases(x.astype(jnp.bfloat16),
                                         KH, KW, stride, padding, Ho, Wo)

    # Output-row tiling: more pipeline steps + bounded f32 accumulator.
    Th = Ho
    for cand in range(1, Ho + 1):
        if Ho % cand == 0 and cand * Wo >= 64 and (cand * Wo) % SUBLANE == 0:
            Th = cand
            break
    R = Ho // Th

    in_specs = [
        pl.BlockSpec((1, P * Hph, Wph, Cs), lambda n, r: (n, 0, 0, 0)),
        pl.BlockSpec((KH * KW * Cin, Coutp), lambda n, r: (0, 0)),
        pl.BlockSpec((1, Coutp), lambda n, r: (0, 0)),
    ]
    args = [x_ph, w, bvec]

    if residual is not None:
        assert residual.shape == (N, Ho, Wo, Coutp), residual.shape
        in_specs.append(pl.BlockSpec((1, Th * Wo, Coutp),
                                     lambda n, r: (n, r, 0)))
        args.append(residual.reshape(N, Ho * Wo, Coutp).astype(jnp.bfloat16))

    scratch = []
    if head is not None:
        fc_w, fc_b = head
        O = fc_w.shape[1]
        Opp = _round_up(O, LANE)
        wfc = jnp.pad(fc_w, ((0, Coutp - fc_w.shape[0]), (0, Opp - O)))
        wfc = wfc.astype(jnp.bfloat16)                     # bf16 MXU operand
        bfc = jnp.pad(fc_b, (0, Opp - O)).astype(jnp.float32)[None, :]
        in_specs += [pl.BlockSpec((Coutp, Opp), lambda n, r: (0, 0)),
                     pl.BlockSpec((1, Opp), lambda n, r: (0, 0))]
        args += [wfc, bfc]
        out_shape = jax.ShapeDtypeStruct((N, 1, Opp), jnp.float32)
        out_specs = pl.BlockSpec((1, 1, Opp), lambda n, r: (n, 0, 0))
        scratch = [pltpu.VMEM((1, Coutp), jnp.float32)]
        sem = ("parallel", "arbitrary")                    # row axis = reduction
    else:
        out_shape = jax.ShapeDtypeStruct((N, Ho * Wo, Coutp), jnp.bfloat16)
        out_specs = pl.BlockSpec((1, Th * Wo, Coutp), lambda n, r: (n, r, 0))
        sem = ("parallel", "parallel")

    def build(stack_taps):
        kern = functools.partial(
            _conv_kernel, KH=KH, KW=KW, stride=stride, Th=Th, Wo=Wo, Hph=Hph,
            nB=nB, Cin=Cin, relu=relu, has_res=residual is not None,
            head=head is not None, inv_hw=1.0 / float(Ho * Wo),
            stack_taps=stack_taps)
        return pl.pallas_call(
            kern,
            out_shape=out_shape,
            grid_spec=pltpu.PrefetchScalarGridSpec(
                num_scalar_prefetch=0, grid=(N, R),
                in_specs=in_specs, out_specs=out_specs,
                scratch_shapes=scratch),
            compiler_params=pltpu.CompilerParams(
                dimension_semantics=sem,
                vmem_limit_bytes=_vmem_limit_bytes()))

    try:
        out = build(stack_taps=True)(*args)
    except Exception:
        # TODO(synk): remove once unaligned lane-dim concatenation inside the
        # kernel is guaranteed by the Mosaic toolchain in use.
        out = build(stack_taps=False)(*args)

    if head is not None:
        return out[:, 0, :head[0].shape[1]]
    return out.reshape(N, Ho, Wo, Coutp)


# ----------------------------------------------------------------------------
# Parameters + model wiring (mirrors the PyTorch ResNet spec)
# ----------------------------------------------------------------------------
def bn_params(key, c):
    k1, k2, k3, k4 = jax.random.split(key, 4)
    return dict(
        gamma=1.0 + 0.1 * jax.random.normal(k1, (c,), jnp.float32),
        beta=0.1 * jax.random.normal(k2, (c,), jnp.float32),
        mean=0.1 * jax.random.normal(k3, (c,), jnp.float32),
        var=jnp.abs(jax.random.normal(k4, (c,), jnp.float32)) + 0.5,
    )


def conv_w(key, cout, cin, k):
    return 0.1 * jax.random.normal(key, (cout, cin, k, k), jnp.float32)


def init_resnet(key, layers, planes, strides, output_size):
    assert len(planes) == len(layers) == len(strides)
    keys = iter(jax.random.split(key, 512))
    params = {
        "stem_w": conv_w(next(keys), planes[0], 3, 3),
        "stem_bn": bn_params(next(keys), planes[0]),
    }
    stages = []
    for i, nblocks in enumerate(layers):
        blocks = []
        for j in range(nblocks):
            inpl = (planes[0] if i == 0 else planes[i - 1]) if j == 0 else planes[i]
            stride = strides[i] if j == 0 else 1
            blk = {
                "stride": stride,
                "conv1": conv_w(next(keys), planes[i], inpl, 3),
                "bn1": bn_params(next(keys), planes[i]),
                "conv2": conv_w(next(keys), planes[i], planes[i], 3),
                "bn2": bn_params(next(keys), planes[i]),
            }
            if stride != 1:  # downsample only when stride != 1 (as in the spec)
                blk["down_conv"] = conv_w(next(keys), planes[i], inpl, 1)
                blk["down_bn"] = bn_params(next(keys), planes[i])
            blocks.append(blk)
        stages.append(blocks)
    params["stages"] = stages
    params["fc_w"] = 0.1 * jax.random.normal(next(keys),
                                             (planes[-1], output_size),
                                             jnp.float32)
    params["fc_b"] = 0.1 * jax.random.normal(next(keys), (output_size,),
                                             jnp.float32)
    return params


def resnet_forward(params, x_nchw):
    x = jnp.transpose(x_nchw, (0, 2, 3, 1)).astype(jnp.bfloat16)  # NCHW -> NHWC
    x = conv_bn_act(x, params["stem_w"], params["stem_bn"],
                    stride=1, padding=1, relu=True)
    stages = params["stages"]
    for si, blocks in enumerate(stages):
        for bi, blk in enumerate(blocks):
            last = (si == len(stages) - 1) and (bi == len(blocks) - 1)
            identity = x
            out = conv_bn_act(x, blk["conv1"], blk["bn1"],
                              stride=blk["stride"], padding=1, relu=True)
            if "down_conv" in blk:
                identity = conv_bn_act(x, blk["down_conv"], blk["down_bn"],
                                       stride=blk["stride"], padding=0,
                                       relu=False)
            head = (params["fc_w"], params["fc_b"]) if last else None
            # conv2 -> bn2 -> (+identity) -> relu (+ fused avgpool + Linear on
            # the final block), all in one kernel.
            x = conv_bn_act(out, blk["conv2"], blk["bn2"], stride=1, padding=1,
                            relu=True, residual=identity, head=head)
    return x  # (N, output_size) f32 logits


# ----------------------------------------------------------------------------
# Pure-JAX reference (mirrors the kernels' bf16 storage points)
# ----------------------------------------------------------------------------
def _conv_ref(x_bf16, w_pt, scale, stride, padding):
    w = (jnp.transpose(w_pt, (2, 3, 1, 0)) * scale).astype(jnp.bfloat16)
    return jax.lax.conv_general_dilated(
        x_bf16, w, (stride, stride), [(padding, padding)] * 2,
        dimension_numbers=("NHWC", "HWIO", "NHWC"),
        preferred_element_type=jnp.float32)


def resnet_ref(params, x_nchw):
    x = jnp.transpose(x_nchw, (0, 2, 3, 1)).astype(jnp.bfloat16)
    s, b = fold_bn(params["stem_bn"])
    x = jax.nn.relu(_conv_ref(x, params["stem_w"], s, 1, 1) + b
                    ).astype(jnp.bfloat16)
    feat = None
    for blocks in params["stages"]:
        for blk in blocks:
            identity = x
            s1, b1 = fold_bn(blk["bn1"])
            out = jax.nn.relu(_conv_ref(x, blk["conv1"], s1, blk["stride"], 1)
                              + b1).astype(jnp.bfloat16)
            if "down_conv" in blk:
                sd, bd = fold_bn(blk["down_bn"])
                identity = (_conv_ref(x, blk["down_conv"], sd, blk["stride"], 0)
                            + bd).astype(jnp.bfloat16)
            s2, b2 = fold_bn(blk["bn2"])
            feat = jax.nn.relu(_conv_ref(out, blk["conv2"], s2, 1, 1) + b2
                               + identity.astype(jnp.float32))
            x = feat.astype(jnp.bfloat16)
    pooled = jnp.mean(feat, axis=(1, 2)).astype(jnp.bfloat16)
    return (jnp.dot(pooled, params["fc_w"].astype(jnp.bfloat16),
                    preferred_element_type=jnp.float32) + params["fc_b"])


if __name__ == "__main__":
    key = jax.random.PRNGKey(0)
    kp, kx = jax.random.split(key)

    # Small ResNet: layers=[1, 1], planes=[32, 64], strides=[1, 2], 10 classes.
    layers, planes, strides = [1, 1], [32, 64], [1, 2]
    params = init_resnet(kp, layers, planes, strides, output_size=10)

    x = jax.random.normal(kx, (2, 3, 16, 16), jnp.float32)  # NCHW, like PyTorch

    out = jax.block_until_ready(resnet_forward(params, x))
    assert out.shape == (2, 10), out.shape

    ref = jax.block_until_ready(resnet_ref(params, x))
    err = float(jnp.max(jnp.abs(out - ref)))
    tol = 3e-2 * (1.0 + float(jnp.max(jnp.abs(ref))))
    assert err < tol, f"mismatch vs reference: err={err} tol={tol}"

    print("KERNEL_OK")
</pallas_src>

<mosaic_0001>
module attributes {stable_mosaic.version = 11 : i64} {
  func.func @_conv_kernel(%arg0: i32, %arg1: i32, %arg2: memref<1x16x16x27xbf16, #tpu.memory_space<vmem>>, %arg3: memref<27x128xbf16, #tpu.memory_space<vmem>>, %arg4: memref<1x128xf32, #tpu.memory_space<vmem>>, %arg5: memref<1x64x128xbf16, #tpu.memory_space<vmem>>) attributes {dimension_semantics = [#tpu.dimension_semantics<parallel>, #tpu.dimension_semantics<parallel>], iteration_bounds = array<i64: 2, 4>, scalar_prefetch = 0 : i64, scratch_operands = 0 : i64, tpu.core_type = #tpu.core_type<tc>, window_params = [{transform_indices = @transform_0, window_bounds = array<i64: 1, 16, 16, 27>}, {pipeline_mode = #tpu.pipeline_mode<synchronous>, transform_indices = @transform_1, window_bounds = array<i64: 27, 128>}, {pipeline_mode = #tpu.pipeline_mode<synchronous>, transform_indices = @transform_2, window_bounds = array<i64: 1, 128>}, {transform_indices = @transform_3, window_bounds = array<i64: 1, 64, 128>}]} {
    %c4_i32 = arith.constant 4 : i32
    %0 = arith.muli %arg1, %c4_i32 : i32
    %1 = tpu.assume_multiple %0, 4 : i32
    %c0_i32 = arith.constant 0 : i32
    %2 = arith.addi %c0_i32, %1 : i32
    %c0 = arith.constant 0 : index
    %3 = arith.index_cast %2 : i32 to index
    %c0_0 = arith.constant 0 : index
    %c0_1 = arith.constant 0 : index
    %4 = vector.load %arg2[%c0, %3, %c0_0, %c0_1] : memref<1x16x16x27xbf16, #tpu.memory_space<vmem>>, vector<1x4x16x27xbf16>
    %5 = vector.shape_cast %4 : vector<1x4x16x27xbf16> to vector<4x16x27xbf16>
    %6 = vector.shape_cast %5 : vector<4x16x27xbf16> to vector<64x27xbf16>
    %c0_2 = arith.constant 0 : index
    %c0_3 = arith.constant 0 : index
    %7 = vector.load %arg3[%c0_2, %c0_3] : memref<27x128xbf16, #tpu.memory_space<vmem>>, vector<27x128xbf16>
    %cst = arith.constant dense<0.000000e+00> : vector<64x128xf32>
    %8 = tpu.matmul %6, %7, %cst {dimension_numbers = #tpu.dot_dimension_numbers<[1], [0], [0], [1], [0, 0, 1, 1], [], []>} : vector<64x27xbf16>, vector<27x128xbf16>, vector<64x128xf32> -> vector<64x128xf32>
    %c0_4 = arith.constant 0 : index
    %c0_5 = arith.constant 0 : index
    %9 = vector.load %arg4[%c0_4, %c0_5] : memref<1x128xf32, #tpu.memory_space<vmem>>, vector<1x128xf32>
    %10 = vector.broadcast %9 : vector<1x128xf32> to vector<64x128xf32>
    %11 = arith.addf %8, %10 : vector<64x128xf32>
    %cst_6 = arith.constant 0.000000e+00 : f32
    %12 = vector.broadcast %cst_6 : f32 to vector<64x128xf32>
    %13 = arith.maximumf %11, %12 : vector<64x128xf32>
    %14 = arith.truncf %13 : vector<64x128xf32> to vector<64x128xbf16>
    %c0_7 = arith.constant 0 : index
    %c0_8 = arith.constant 0 : index
    %c0_9 = arith.constant 0 : index
    %15 = vector.load %arg5[%c0_7, %c0_8, %c0_9] : memref<1x64x128xbf16, #tpu.memory_space<vmem>>, vector<1x64x128xbf16>
    %16 = vector.shape_cast %15 : vector<1x64x128xbf16> to vector<64x128xbf16>
    %17 = vector.shape_cast %14 : vector<64x128xbf16> to vector<1x64x128xbf16>
    tpu.vector_store %arg5[%c0_7, %c0_8, %c0_9], %17 {strides = array<i32>} : memref<1x64x128xbf16, #tpu.memory_space<vmem>>, vector<1x64x128xbf16>,
    return
  }
  func.func @transform_0(%arg0: i32, %arg1: i32) -> (i32, i32, i32, i32) {
    %c0_i32 = arith.constant 0 : i32
    %c0_i32_0 = arith.constant 0 : i32
    %c0_i32_1 = arith.constant 0 : i32
    %c0_i32_2 = arith.constant 0 : i32
    return %arg0, %c0_i32, %c0_i32_0, %c0_i32_1 : i32, i32, i32, i32
  }
  func.func @transform_1(%arg0: i32, %arg1: i32) -> (i32, i32) {
    %c0_i32 = arith.constant 0 : i32
    %c0_i32_0 = arith.constant 0 : i32
    %c0_i32_1 = arith.constant 0 : i32
    return %c0_i32, %c0_i32_0 : i32, i32
  }
  func.func @transform_2(%arg0: i32, %arg1: i32) -> (i32, i32) {
    %c0_i32 = arith.constant 0 : i32
    %c0_i32_0 = arith.constant 0 : i32
    %c0_i32_1 = arith.constant 0 : i32
    return %c0_i32, %c0_i32_0 : i32, i32
  }
  func.func @transform_3(%arg0: i32, %arg1: i32) -> (i32, i32, i32) {
    %c0_i32 = arith.constant 0 : i32
    %c0_i32_0 = arith.constant 0 : i32
    return %arg0, %arg1, %c0_i32 : i32, i32, i32
  }
}

module attributes {stable_mosaic.version = 11 : i64} {
  func.func @_conv_kernel(%arg0: i32, %arg1: i32, %arg2: memref<1x16x16x27xbf16, #tpu.memory_space<vmem>>, %arg3: memref<27x128xbf16, #tpu.memory_space<vmem>>, %arg4: memref<1x128xf32, #tpu.memory_space<vmem>>, %arg5: memref<1x64x128xbf16, #tpu.memory_space<vmem>>) attributes {dimension_semantics = [#tpu.dimension_semantics<parallel>, #tpu.dimension_semantics<parallel>], iteration_bounds = array<i64: 2, 4>, scalar_prefetch = 0 : i64, scratch_operands = 0 : i64, tpu.core_type = #tpu.core_type<tc>, window_params = [{transform_indices = @transform_0, window_bounds = array<i64: 1, 16, 16, 27>}, {pipeline_mode = #tpu.pipeline_mode<synchronous>, transform_indices = @transform_1, window_bounds = array<i64: 27, 128>}, {pipeline_mode = #tpu.pipeline_mode<synchronous>, transform_indices = @transform_2, window_bounds = array<i64: 1, 128>}, {transform_indices = @transform_3, window_bounds = array<i64: 1, 64, 128>}]} {
    %c4_i32 = arith.constant 4 : i32
    %0 = arith.muli %arg1, %c4_i32 : i32
    %1 = tpu.assume_multiple %0, 4 : i32
    %c0_i32 = arith.constant 0 : i32
    %2 = arith.addi %c0_i32, %1 : i32
    %c0 = arith.constant 0 : index
    %3 = arith.index_cast %2 : i32 to index
    %c0_0 = arith.constant 0 : index
    %c0_1 = arith.constant 0 : index
    %4 = vector.load %arg2[%c0, %3, %c0_0, %c0_1] : memref<1x16x16x27xbf16, #tpu.memory_space<vmem>>, vector<1x4x16x27xbf16>
    %5 = vector.shape_cast %4 : vector<1x4x16x27xbf16> to vector<4x16x27xbf16>
    %cst = arith.constant 0.000000e+00 : f32
    %6 = vector.broadcast %cst : f32 to vector<64x128xf32>
    %7 = vector.shape_cast %5 : vector<4x16x27xbf16> to vector<64x27xbf16>
    %c0_2 = arith.constant 0 : index
    %c0_3 = arith.constant 0 : index
    %8 = vector.load %arg3[%c0_2, %c0_3] : memref<27x128xbf16, #tpu.memory_space<vmem>>, vector<27x128xbf16>
    %cst_4 = arith.constant dense<0.000000e+00> : vector<64x128xf32>
    %9 = tpu.matmul %7, %8, %cst_4 {dimension_numbers = #tpu.dot_dimension_numbers<[1], [0], [0], [1], [0, 0, 1, 1], [], []>} : vector<64x27xbf16>, vector<27x128xbf16>, vector<64x128xf32> -> vector<64x128xf32>
    %10 = arith.addf %6, %9 : vector<64x128xf32>
    %c0_5 = arith.constant 0 : index
    %c0_6 = arith.constant 0 : index
    %11 = vector.load %arg4[%c0_5, %c0_6] : memref<1x128xf32, #tpu.memory_space<vmem>>, vector<1x128xf32>
    %12 = vector.broadcast %11 : vector<1x128xf32> to vector<64x128xf32>
    %13 = arith.addf %10, %12 : vector<64x128xf32>
    %cst_7 = arith.constant 0.000000e+00 : f32
    %14 = vector.broadcast %cst_7 : f32 to vector<64x128xf32>
    %15 = arith.maximumf %13, %14 : vector<64x128xf32>
    %16 = arith.truncf %15 : vector<64x128xf32> to vector<64x128xbf16>
    %c0_8 = arith.constant 0 : index
    %c0_9 = arith.constant 0 : index
    %c0_10 = arith.constant 0 : index
    %17 = vector.load %arg5[%c0_8, %c0_9, %c0_10] : memref<1x64x128xbf16, #tpu.memory_space<vmem>>, vector<1x64x128xbf16>
    %18 = vector.shape_cast %17 : vector<1x64x128xbf16> to vector<64x128xbf16>
    %19 = vector.shape_cast %16 : vector<64x128xbf16> to vector<1x64x128xbf16>
    tpu.vector_store %arg5[%c0_8, %c0_9, %c0_10], %19 {strides = array<i32>} : memref<1x64x128xbf16, #tpu.memory_space<vmem>>, vector<1x64x128xbf16>,
    return
  }
  func.func @transform_0(%arg0: i32, %arg1: i32) -> (i32, i32, i32, i32) {
    %c0_i32 = arith.constant 0 : i32
    %c0_i32_0 = arith.constant 0 : i32
    %c0_i32_1 = arith.constant 0 : i32
    %c0_i32_2 = arith.constant 0 : i32
    return %arg0, %c0_i32, %c0_i32_0, %c0_i32_1 : i32, i32, i32, i32
  }
  func.func @transform_1(%arg0: i32, %arg1: i32) -> (i32, i32) {
    %c0_i32 = arith.constant 0 : i32
    %c0_i32_0 = arith.constant 0 : i32
    %c0_i32_1 = arith.constant 0 : i32
    return %c0_i32, %c0_i32_0 : i32, i32
  }
  func.func @transform_2(%arg0: i32, %arg1: i32) -> (i32, i32) {
    %c0_i32 = arith.constant 0 : i32
    %c0_i32_0 = arith.constant 0 : i32
    %c0_i32_1 = arith.constant 0 : i32
    return %c0_i32, %c0_i32_0 : i32, i32
  }
  func.func @transform_3(%arg0: i32, %arg1: i32) -> (i32, i32, i32) {
    %c0_i32 = arith.constant 0 : i32
    %c0_i32_0 = arith.constant 0 : i32
    return %arg0, %arg1, %c0_i32 : i32, i32, i32
  }
}

</mosaic_0001>

<llo_original>
// kernel: tpu_custom_call.1
$region0: #{tpu_custom_call.1}
  #allocation0 [shape = 'u32[]', space=smem, size = 0x4, offset = 0x4, fixed_abs, tag = 'smem constant byte address 0x4 - core index']
  #allocation1 [shape = 'u32[72,128]{1,0:T(1,128)}', space=vmem, size = 0x9000, scoped, tag = 'internal scratch']
  %s0 = inlined_call_operand.hbm [shape: bf16[2,16,16,27], index: 0, kind: input, shape index: {}]
  %s1 = inlined_call_operand.hbm [shape: bf16[27,128], index: 1, kind: input, shape index: {}]
  %s2 = inlined_call_operand.vmem [shape: f32[1,128], index: 2, kind: input, shape index: {}]
  %s3 = inlined_call_operand.hbm [shape: bf16[2,256,128], index: 3, kind: output, shape index: {}]
  %s4 = sld [smem:[#allocation0]]
  $region53: #{tpu_custom_call.1} parent=0
    _
  %s6 = ssub.s32 1, %s4
  %s7 = scalar_select 0, %s6, %s4
  $region1: #{tpu_custom_call.1} parent=0
    #allocation2 [shape = 'u8[131072]{0}', space=vmem, size = 0x20000, scoped, tag = 'input window, operand 0']
    #allocation3 [shape = 's32[2]{0}', space=sflag, size = 0x8, scoped, tag = 'scoped memory for tpu_custom_call.1']
    #allocation4 [shape = 's32[2]{0}', space=sflag, size = 0x8, scoped, tag = 'scoped memory for tpu_custom_call.1']
    #allocation5 [shape = 'u8[8192]{0}', space=vmem, size = 0x2000, scoped, tag = 'input window, operand 1, single buffered']
    #allocation6 [shape = 's32[1]{0}', space=sflag, size = 0x4, scoped, tag = 'scoped memory for tpu_custom_call.1']
    #allocation7 [shape = 'u8[32768]{0}', space=vmem, size = 0x8000, scoped, tag = 'output window, operand 0']
    %8 = vsyncpa [#allocation3], 0
    %s9 = scalar_lea.sflag [#allocation3], 1
    %10 = vsyncpa %s9, 0
    %11 = vsyncpa [#allocation6], 0
    %12 = vsyncpa [#allocation4], 0
    %s13 = scalar_lea.sflag [#allocation4], 1
    %14 = vsyncpa %s13, 0
    loop: start=0, step=1, limit=10
    $region2: #{tpu_custom_call.1} parent=1 // loop_pre_header
      _
    $region3: #{tpu_custom_call.1} parent=1 // loop_header
      %s16 = sphi 0, %s20
      %p17 = scmp.ge.s32.totalorder %s16, 10
      %s23 = sphi 0, %s35
      %s24 = sphi 0, %s31
      %s25 = sphi 0, %s23
      %s26 = sphi 0, %s24
      %s27 = sphi 0, %s25
      %s28 = sphi 0, %s26
      %s38 = sphi 0, %s40
      %s41 = sphi 0, %s38
      %s42 = sphi 0, %s41
      %s58 = sphi 0, %s42
      %s62 = sphi 0, %s62
      %s64 = sphi 0, %s62
      %s65 = sphi 0, %s64
      %s79 = sphi 0, %s65
      %s83 = sphi 0, %s83
      %s85 = sphi 0, %s83
      %s86 = sphi 0, %s85
      %s100 = sphi 0, %s86
      %s108 = sphi 0, %s110
      %s111 = sphi 0, %s108
      %s112 = sphi 0, %s111
      %s128 = sphi 0, %s112
    $region4: #{tpu_custom_call.1} parent=1 // loop_header_branch
      %19 = sbr.rel (%p17) target = $region8
    $region5: #{tpu_custom_call.1} parent=1 // loop_body
      %s21 = ssub.s32 %s16, 1
      %s22 = ssub.s32 %s16, 2
      %s29 = sadd.s32 1, %s24
      %p30 = scmp.ge.s32.totalorder %s29, 4
      %s31 = scalar_select %p30, 0, %s29
      %s32 = sadd.s32 1, %s23
      %s33 = scalar_select %p30, %s32, %s23
      %p34 = scmp.ge.s32.totalorder %s33, 2
      %s35 = scalar_select %p34, 0, %s33
      %s36 = ssub.s32 %s23, %s35
      %p37 = scmp.eq.s32.totalorder %s36, 0
      %s39 = sadd.s32 %s38, 1
      %s40 = scalar_select %p37, %s38, %s39
      %p43 = pneg %p37
      %p44 = scmp.eq.s32.totalorder %s16, 7
      %p45 = por %p43, %p44
      %p46 = scmp.ne.s32.totalorder %s38, %s41
      %p47 = scmp.eq.s32.totalorder %s16, 0
      %p48 = por %p46, %p47
      %p49 = scmp.ne.s32.totalorder %s38, %s41
      %p50 = scmp.eq.s32.totalorder %s21, 7
      %p51 = por %p49, %p50
      %p52 = scmp.ne.s32.totalorder %s41, %s42
      %p53 = scmp.eq.s32.totalorder %s21, 0
      %p54 = por %p52, %p53
      %p55 = scmp.ne.s32.totalorder %s41, %s42
      %p56 = scmp.eq.s32.totalorder %s22, 7
      %p57 = por %p55, %p56
      %p59 = scmp.ne.s32.totalorder %s42, %s58
      %p60 = scmp.eq.s32.totalorder %s22, 0
      %p61 = por %p59, %p60
      %s63 = sadd.s32 %s62, 1
      %p66 = scmp.eq.s32.totalorder %s16, 7
      %p67 = scmp.ne.s32.totalorder %s62, %s64
      %p68 = scmp.eq.s32.totalorder %s16, 0
      %p69 = por %p67, %p68
      %p70 = scmp.ne.s32.totalorder %s62, %s64
      %p71 = scmp.eq.s32.totalorder %s21, 7
      %p72 = por %p70, %p71
      %p73 = scmp.ne.s32.totalorder %s64, %s65
      %p74 = scmp.eq.s32.totalorder %s21, 0
      %p75 = por %p73, %p74
      %p76 = scmp.ne.s32.totalorder %s64, %s65
      %p77 = scmp.eq.s32.totalorder %s22, 7
      %p78 = por %p76, %p77
      %p80 = scmp.ne.s32.totalorder %s65, %s79
      %p81 = scmp.eq.s32.totalorder %s22, 0
      %p82 = por %p80, %p81
      %s84 = sadd.s32 %s83, 1
      %p87 = scmp.eq.s32.totalorder %s16, 7
      %p88 = scmp.ne.s32.totalorder %s83, %s85
      %p89 = scmp.eq.s32.totalorder %s16, 0
      %p90 = por %p88, %p89
      %p91 = scmp.ne.s32.totalorder %s83, %s85
      %p92 = scmp.eq.s32.totalorder %s21, 7
      %p93 = por %p91, %p92
      %p94 = scmp.ne.s32.totalorder %s85, %s86
      %p95 = scmp.eq.s32.totalorder %s21, 0
      %p96 = por %p94, %p95
      %p97 = scmp.ne.s32.totalorder %s85, %s86
      %p98 = scmp.eq.s32.totalorder %s22, 7
      %p99 = por %p97, %p98
      %p101 = scmp.ne.s32.totalorder %s86, %s100
      %p102 = scmp.eq.s32.totalorder %s22, 0
      %p103 = por %p101, %p102
      %s104 = ssub.s32 %s23, %s35
      %s105 = ssub.s32 %s24, %s31
      %s106 = sor.u32 %s104, %s105
      %p107 = scmp.eq.s32.totalorder %s106, 0
      %s109 = sadd.s32 %s108, 1
      %s110 = scalar_select %p107, %s108, %s109
      %p113 = pneg %p107
      %p114 = scmp.eq.s32.totalorder %s16, 7
      %p115 = por %p113, %p114
      %p116 = scmp.ne.s32.totalorder %s108, %s111
      %p117 = scmp.eq.s32.totalorder %s16, 0
      %p118 = por %p116, %p117
      %p119 = scmp.ne.s32.totalorder %s108, %s111
      %p120 = scmp.eq.s32.totalorder %s21, 7
      %p121 = por %p119, %p120
      %p122 = scmp.ne.s32.totalorder %s111, %s112
      %p123 = scmp.eq.s32.totalorder %s21, 0
      %p124 = por %p122, %p123
      %p125 = scmp.ne.s32.totalorder %s111, %s112
      %p126 = scmp.eq.s32.totalorder %s22, 7
      %p127 = por %p125, %p126
      %p129 = scmp.ne.s32.totalorder %s112, %s128
      %p130 = scmp.eq.s32.totalorder %s22, 0
      %p131 = por %p129, %p130
      %p132 = scmp.le.s32.totalorder 1, %s16
      %p133 = scmp.lt.s32.totalorder %s16, 9
      %p134 = pnand %p132, %p133
      %p135 = pneg %p134
      // Predicated region
      $region9: #{tpu_custom_call.1} parent=5 // pred_check
        _
      $region10: #{tpu_custom_call.1} parent=5 // pred_check_branch
        %137 = sbr.rel (%p134) target = $region12
      $region11: #{tpu_custom_call.1} parent=5 // pred_region
        %s138 = ssub.s32 %s16, 1
        // Predicated region
        $region13: #{tpu_custom_call.1} parent=11 // pred_check
          %p139 = pneg %p75
        $region14: #{tpu_custom_call.1} parent=11 // pred_check_branch
          %141 = sbr.rel (%p139) target = $region16
        $region15: #{tpu_custom_call.1} parent=11 // pred_region
          %143 = vsyncadd [#allocation6], 0
          %s144 = sshll.u32 %s1, 4
          %s145 = int_to_ptr.hbm [resolvable:$true] %s144
          %s146 = sshll.u32 [#allocation5], 4
          %s147 = int_to_ptr.vmem [resolvable:$true] %s146
          %152 = dma.hbm_to_vmem [thread:$0]  %s145, 256, %s147, [#allocation6], 64, 64, 4
        $region16: #{tpu_custom_call.1} parent=11 // pred_fallthru
          _
        // Predicated region
        $region17: #{tpu_custom_call.1} parent=11 // pred_check
          %p153 = pneg %p96
        $region18: #{tpu_custom_call.1} parent=11 // pred_check_branch
          %155 = sbr.rel (%p153) target = $region20
        $region19: #{tpu_custom_call.1} parent=11 // pred_region
          _
        $region20: #{tpu_custom_call.1} parent=11 // pred_fallthru
          _
      $region12: #{tpu_custom_call.1} parent=5 // pred_fallthru
        _
      %p156 = scmp.lt.s32.totalorder %s16, 8
      // Predicated region
      $region21: #{tpu_custom_call.1} parent=5 // pred_check
        %p157 = pneg %p156
      $region22: #{tpu_custom_call.1} parent=5 // pred_check_branch
        %159 = sbr.rel (%p157) target = $region24
      $region23: #{tpu_custom_call.1} parent=5 // pred_region
        // Predicated region
        $region25: #{tpu_custom_call.1} parent=23 // pred_check
          %p160 = pneg %p48
        $region26: #{tpu_custom_call.1} parent=23 // pred_check_branch
          %162 = sbr.rel (%p160) target = $region28
        $region27: #{tpu_custom_call.1} parent=23 // pred_region
          %s163 = sand.u32 %s38, 1
          %s164 = scalar_lea.sflag [#allocation3], %s163
          %s165 = sand.u32 %s38, 1
          %s166 = smul.addr %s165, 128
          %s167 = scalar_lea.vmem [#allocation2], %s166
          %169 = vsyncadd %s164, 0
          %s170 = smul.addr %s23, 32
          %s171 = smul.addr %s170, 4
          %s172 = scalar_lea.hbm %s0, %s171
          %s173 = sshll.u32 %s172, 4
          %s174 = int_to_ptr.hbm [resolvable:$true] %s173
          %s175 = sshll.u32 %s167, 4
          %s176 = int_to_ptr.vmem [resolvable:$true] %s175
          %181 = dma.hbm_to_vmem [thread:$0]  %s174, 2048, %s176, %s164, 64, 64, 4
        $region28: #{tpu_custom_call.1} parent=23 // pred_fallthru
          _
      $region24: #{tpu_custom_call.1} parent=5 // pred_fallthru
        _
      %p182 = scmp.le.s32.totalorder 1, %s16
      %p183 = scmp.lt.s32.totalorder %s16, 9
      %p184 = pnand %p182, %p183
      %p185 = pneg %p184
      // Predicated region
      $region29: #{tpu_custom_call.1} parent=5 // pred_check
        _
      $region30: #{tpu_custom_call.1} parent=5 // pred_check_branch
        %187 = sbr.rel (%p184) target = $region32
      $region31: #{tpu_custom_call.1} parent=5 // pred_region
        %s188 = ssub.s32 %s16, 1
        %s189 = sand.u32 %s41, 1
        %s190 = scalar_lea.sflag [#allocation3], %s189
        %s191 = sand.u32 %s41, 1
        %s192 = smul.addr %s191, 128
        %s193 = scalar_lea.vmem [#allocation2], %s192
        // Predicated region
        $region33: #{tpu_custom_call.1} parent=31 // pred_check
          %p194 = pneg %p54
        $region34: #{tpu_custom_call.1} parent=31 // pred_check_branch
          %196 = sbr.rel (%p194) target = $region36
        $region35: #{tpu_custom_call.1} parent=31 // pred_region
          %198 = dma.done %s190, 2048
        $region36: #{tpu_custom_call.1} parent=31 // pred_fallthru
          _
        // Predicated region
        $region37: #{tpu_custom_call.1} parent=31 // pred_check
          %p199 = pneg %p75
        $region38: #{tpu_custom_call.1} parent=31 // pred_check_branch
          %201 = sbr.rel (%p199) target = $region40
        $region39: #{tpu_custom_call.1} parent=31 // pred_region
          %203 = dma.done [#allocation6], 256
        $region40: #{tpu_custom_call.1} parent=31 // pred_fallthru
          _
        %s204 = sand.u32 %s41, 1
        %s205 = scalar_lea.sflag [#allocation3], %s204
        %s206 = sand.u32 %s41, 1
        %s207 = smul.addr %s206, 128
        %s208 = scalar_lea.vmem [#allocation2], %s207
        %p209 = pneg %p54
        %p210 = pneg %p51
        %p211 = pneg %p75
        %p212 = pneg %p72
        %p213 = pneg %p96
        %p214 = pneg %p93
        %p215 = pneg %p124
        %p216 = pneg %p121
        %s217 = sand.u32 %s111, 1
        %s218 = scalar_lea.sflag [#allocation4], %s217
        %s219 = sand.u32 %s111, 1
        %s220 = smul.addr %s219, 32
        %s221 = scalar_lea.vmem [#allocation7], %s220
        %s222 = smul.u32 8, %s26
        %s224 = smul.u32 %s26, 4
        %s225 = smul.u32 %s224, 2
        %s226 = smul.addr %s225, 4
        %s227 = scalar_lea.vmem %s193, %s226 [#allocation2]
        %v228 = vld [vmem:[%s227] sm:$0xf]
        %v229 = vld [vmem:[%s227 + $0x4] sm:$0xf]
        %v230 = vld [vmem:[%s227 + $0x8] sm:$0xf]
        %v231 = vld [vmem:[%s227 + $0xc] sm:$0xf]
        %v232 = vld [vmem:[%s227 + $0x10] sm:$0xf]
        %v233 = vld [vmem:[%s227 + $0x14] sm:$0xf]
        %v234 = vld [vmem:[%s227 + $0x18] sm:$0xf]
        %v235 = vld [vmem:[%s227 + $0x1c] sm:$0xf]
        %v236 = vld [vmem:[#allocation5] sm:$0xf]
        %v237 = vld [vmem:[#allocation5 + $0x4] sm:$0xf]
        %v238 = vld [vmem:[#allocation5 + $0x8] sm:$0xf]
        %v239 = vld [vmem:[#allocation5 + $0xc] sm:$0x3]
        %v240 = vld [vmem:[%s2] sm:$0x1]
        %v242 = vperm.slane %v240, 0
        %v252 = vunpack.c.l.b16 %v228
        %v253 = vunpack.c.l.b16 %v229
        %v254 = vunpack.c.l.b16 %v230
        %v255 = vunpack.c.l.b16 %v231
        %v256 = vunpack.c.l.b16 %v232
        %v257 = vunpack.c.l.b16 %v233
        %v258 = vunpack.c.l.b16 %v234
        %v259 = vunpack.c.l.b16 %v235
        %v260 = vpack.c.b16 %v253, %v252
        %v261 = vpack.c.b16 %v255, %v254
        %v262 = vpack.c.b16 %v257, %v256
        %v263 = vpack.c.b16 %v259, %v258
        %v268 = vunpack.c.l.b16 %v236
        %v269 = vunpack.c.l.b16 %v237
        %v270 = vunpack.c.l.b16 %v238
        %v271 = vunpack.c.l.b16 %v239
        %v272 = vpack.c.b16 %v269, %v268
        %v273 = vpack.c.b16 %v271, %v270
        %vm275 = vcmask 220160
        %v277 = vsel %vm275, %v260, 0
        %v280 = vsel %vm275, %v261, 0
        %v283 = vsel %vm275, %v262, 0
        %v286 = vsel %vm275, %v263, 0
        %vm288 = vcmask 1044480
        %vm289 = vcmask 1045504
        %v290 = vsel %vm288, 4294967295, 65535
        %v291 = vsel %vm289, %v290, 0
        %v293 = vand.u32 %v273, %v291
        %295 = vmatpush.bf16.msra.mxu0 0
        %296 = vmatpush.bf16.msra.mxu0 0
        %297 = vmatpush.bf16.msra.mxu0 0
        %298 = vmatpush.bf16.msra.mxu0 0
        %299 = vmatpush.bf16.msra.mxu0 0
        %300 = vmatpush.bf16.msra.mxu0 0
        %301 = vmatpush.bf16.msra.mxu0 %v293
        %302 = vmatpush.bf16.msra.mxu0 %v272
        %303 = vmatmul.bf16.gmra.mxu0 %v277
        %v304 = vpop.f32.mrf.mxu0
        %v305 = vadd.f32 %v242, %v304
        %v306 = vpop.f32.mrf.mxu0
        %v307 = vadd.f32 %v242, %v306
        %308 = vmatmul.bf16.gmra.mxu0 %v280
        %v309 = vpop.f32.mrf.mxu0
        %v310 = vadd.f32 %v242, %v309
        %v311 = vpop.f32.mrf.mxu0
        %v312 = vadd.f32 %v242, %v311
        %313 = vmatmul.bf16.gmra.mxu0 %v283
        %v314 = vpop.f32.mrf.mxu0
        %v315 = vadd.f32 %v242, %v314
        %v316 = vpop.f32.mrf.mxu0
        %v317 = vadd.f32 %v242, %v316
        %318 = vmatmul.bf16.gmra.mxu0 %v286
        %v319 = vpop.f32.mrf.mxu0
        %v320 = vadd.f32 %v242, %v319
        %v321 = vpop.f32.mrf.mxu0
        %v322 = vadd.f32 %v242, %v321
        %323 = vdwg.mxu0
        %v324 = vmax.f32 %v305, 0.0
        %v325 = vmax.f32 %v307, 0.0
        %v326 = vmax.f32 %v310, 0.0
        %v327 = vmax.f32 %v312, 0.0
        %v328 = vmax.f32 %v315, 0.0
        %v329 = vmax.f32 %v317, 0.0
        %v330 = vmax.f32 %v320, 0.0
        %v331 = vmax.f32 %v322, 0.0
        %v332 = vpack.c.bf16 %v324, %v324
        %v333 = vpack.c.bf16 %v325, %v325
        %v334 = vpack.c.bf16 %v326, %v326
        %v335 = vpack.c.bf16 %v327, %v327
        %v336 = vpack.c.bf16 %v328, %v328
        %v337 = vpack.c.bf16 %v329, %v329
        %v338 = vpack.c.bf16 %v330, %v330
        %v339 = vpack.c.bf16 %v331, %v331
        %340 = vst [vmem:[%s221] sm:$0xf] %v332
        %341 = vst [vmem:[%s221 + $0x4] sm:$0xf] %v333
        %342 = vst [vmem:[%s221 + $0x8] sm:$0xf] %v334
        %343 = vst [vmem:[%s221 + $0xc] sm:$0xf] %v335
        %344 = vst [vmem:[%s221 + $0x10] sm:$0xf] %v336
        %345 = vst [vmem:[%s221 + $0x14] sm:$0xf] %v337
        %346 = vst [vmem:[%s221 + $0x18] sm:$0xf] %v338
        %347 = vst [vmem:[%s221 + $0x1c] sm:$0xf] %v339
        %s348 = sand.u32 %s111, 1
        %s349 = scalar_lea.sflag [#allocation4], %s348
        %s350 = sand.u32 %s111, 1
        %s351 = smul.addr %s350, 32
        %s352 = scalar_lea.vmem [#allocation7], %s351
        // Predicated region
        $region41: #{tpu_custom_call.1} parent=31 // pred_check
          %p353 = pneg %p121
        $region42: #{tpu_custom_call.1} parent=31 // pred_check_branch
          %355 = sbr.rel (%p353) target = $region44
        $region43: #{tpu_custom_call.1} parent=31 // pred_region
          %s356 = smul.u32 8, %s26
          %358 = vsyncadd %s349, 0
          %s359 = smul.addr %s25, 32
          %s360 = sadd.s32 %s356, %s359
          %s361 = smul.addr %s360, 4
          %s362 = scalar_lea.hbm %s3, %s361
          %s363 = sshll.u32 %s352, 4
          %s364 = int_to_ptr.vmem [resolvable:$true] %s363
          %s365 = sshll.u32 %s362, 4
          %s366 = int_to_ptr.hbm [resolvable:$true] %s365
          %371 = dma.vmem_to_hbm [thread:$0]  %s364, 512, %s366, %s349, 64, 64, 4
        $region44: #{tpu_custom_call.1} parent=31 // pred_fallthru
          _
      $region32: #{tpu_custom_call.1} parent=5 // pred_fallthru
        _
      %p372 = scmp.le.s32.totalorder 2, %s16
      // Predicated region
      $region45: #{tpu_custom_call.1} parent=5 // pred_check
        %p373 = pneg %p372
      $region46: #{tpu_custom_call.1} parent=5 // pred_check_branch
        %375 = sbr.rel (%p373) target = $region48
      $region47: #{tpu_custom_call.1} parent=5 // pred_region
        %s376 = ssub.s32 %s16, 2
        // Predicated region
        $region49: #{tpu_custom_call.1} parent=47 // pred_check
          %p377 = pneg %p127
        $region50: #{tpu_custom_call.1} parent=47 // pred_check_branch
          %379 = sbr.rel (%p377) target = $region52
        $region51: #{tpu_custom_call.1} parent=47 // pred_region
          %s380 = sand.u32 %s112, 1
          %s381 = scalar_lea.sflag [#allocation4], %s380
          %s382 = sand.u32 %s112, 1
          %s383 = smul.addr %s382, 32
          %s384 = scalar_lea.vmem [#allocation7], %s383
          %386 = dma.done %s381, 512
        $region52: #{tpu_custom_call.1} parent=47 // pred_fallthru
          _
      $region48: #{tpu_custom_call.1} parent=5 // pred_fallthru
        _
    $region6: #{tpu_custom_call.1} parent=1 // loop_footer
      %s20 = sadd.s32 1, %s16
    $region7: #{tpu_custom_call.1} parent=1 // loop_footer_branch
      %15 = sbr.rel target = $region3
    $region8: #{tpu_custom_call.1} parent=1 // loop_exit
      _
    %387 = vsyncpa [#allocation3], 1
    %s388 = scalar_lea.sflag [#allocation3], 1
    %389 = vsyncpa %s388, 1
    %390 = vsyncpa [#allocation6], 1
    %391 = vsyncpa [#allocation4], 1
    %s392 = scalar_lea.sflag [#allocation4], 1
    %393 = vsyncpa %s392, 1

// kernel: tpu_custom_call.1
$region0: #{tpu_custom_call.1}
  #allocation0 [shape = 'u32[]', space=smem, size = 0x4, offset = 0x4, fixed_abs, tag = 'smem constant byte address 0x4 - core index']
  #allocation1 [shape = 'u32[72,128]{1,0:T(1,128)}', space=vmem, size = 0x9000, scoped, tag = 'internal scratch']
  %s0 = inlined_call_operand.hbm [shape: bf16[2,16,16,27], index: 0, kind: input, shape index: {}]
  %s1 = inlined_call_operand.hbm [shape: bf16[27,128], index: 1, kind: input, shape index: {}]
  %s2 = inlined_call_operand.vmem [shape: f32[1,128], index: 2, kind: input, shape index: {}]
  %s3 = inlined_call_operand.hbm [shape: bf16[2,256,128], index: 3, kind: output, shape index: {}]
  %s4 = sld [smem:[#allocation0]]
  $region53: #{tpu_custom_call.1} parent=0
    _
  %s6 = ssub.s32 1, %s4
  %s7 = scalar_select 0, %s6, %s4
  $region1: #{tpu_custom_call.1} parent=0
    #allocation2 [shape = 'u8[131072]{0}', space=vmem, size = 0x20000, scoped, tag = 'input window, operand 0']
    #allocation3 [shape = 's32[2]{0}', space=sflag, size = 0x8, scoped, tag = 'scoped memory for tpu_custom_call.1']
    #allocation4 [shape = 's32[2]{0}', space=sflag, size = 0x8, scoped, tag = 'scoped memory for tpu_custom_call.1']
    #allocation5 [shape = 'u8[8192]{0}', space=vmem, size = 0x2000, scoped, tag = 'input window, operand 1, single buffered']
    #allocation6 [shape = 's32[1]{0}', space=sflag, size = 0x4, scoped, tag = 'scoped memory for tpu_custom_call.1']
    #allocation7 [shape = 'u8[32768]{0}', space=vmem, size = 0x8000, scoped, tag = 'output window, operand 0']
    %8 = vsyncpa [#allocation3], 0
    %s9 = scalar_lea.sflag [#allocation3], 1
    %10 = vsyncpa %s9, 0
    %11 = vsyncpa [#allocation6], 0
    %12 = vsyncpa [#allocation4], 0
    %s13 = scalar_lea.sflag [#allocation4], 1
    %14 = vsyncpa %s13, 0
    loop: start=0, step=1, limit=10
    $region2: #{tpu_custom_call.1} parent=1 // loop_pre_header
      _
    $region3: #{tpu_custom_call.1} parent=1 // loop_header
      %s16 = sphi 0, %s20
      %p17 = scmp.ge.s32.totalorder %s16, 10
      %s23 = sphi 0, %s35
      %s24 = sphi 0, %s31
      %s25 = sphi 0, %s23
      %s26 = sphi 0, %s24
      %s27 = sphi 0, %s25
      %s28 = sphi 0, %s26
      %s38 = sphi 0, %s40
      %s41 = sphi 0, %s38
      %s42 = sphi 0, %s41
      %s58 = sphi 0, %s42
      %s62 = sphi 0, %s62
      %s64 = sphi 0, %s62
      %s65 = sphi 0, %s64
      %s79 = sphi 0, %s65
      %s83 = sphi 0, %s83
      %s85 = sphi 0, %s83
      %s86 = sphi 0, %s85
      %s100 = sphi 0, %s86
      %s108 = sphi 0, %s110
      %s111 = sphi 0, %s108
      %s112 = sphi 0, %s111
      %s128 = sphi 0, %s112
    $region4: #{tpu_custom_call.1} parent=1 // loop_header_branch
      %19 = sbr.rel (%p17) target = $region8
    $region5: #{tpu_custom_call.1} parent=1 // loop_body
      %s21 = ssub.s32 %s16, 1
      %s22 = ssub.s32 %s16, 2
      %s29 = sadd.s32 1, %s24
      %p30 = scmp.ge.s32.totalorder %s29, 4
      %s31 = scalar_select %p30, 0, %s29
      %s32 = sadd.s32 1, %s23
      %s33 = scalar_select %p30, %s32, %s23
      %p34 = scmp.ge.s32.totalorder %s33, 2
      %s35 = scalar_select %p34, 0, %s33
      %s36 = ssub.s32 %s23, %s35
      %p37 = scmp.eq.s32.totalorder %s36, 0
      %s39 = sadd.s32 %s38, 1
      %s40 = scalar_select %p37, %s38, %s39
      %p43 = pneg %p37
      %p44 = scmp.eq.s32.totalorder %s16, 7
      %p45 = por %p43, %p44
      %p46 = scmp.ne.s32.totalorder %s38, %s41
      %p47 = scmp.eq.s32.totalorder %s16, 0
      %p48 = por %p46, %p47
      %p49 = scmp.ne.s32.totalorder %s38, %s41
      %p50 = scmp.eq.s32.totalorder %s21, 7
      %p51 = por %p49, %p50
      %p52 = scmp.ne.s32.totalorder %s41, %s42
      %p53 = scmp.eq.s32.totalorder %s21, 0
      %p54 = por %p52, %p53
      %p55 = scmp.ne.s32.totalorder %s41, %s42
      %p56 = scmp.eq.s32.totalorder %s22, 7
      %p57 = por %p55, %p56
      %p59 = scmp.ne.s32.totalorder %s42, %s58
      %p60 = scmp.eq.s32.totalorder %s22, 0
      %p61 = por %p59, %p60
      %s63 = sadd.s32 %s62, 1
      %p66 = scmp.eq.s32.totalorder %s16, 7
      %p67 = scmp.ne.s32.totalorder %s62, %s64
      %p68 = scmp.eq.s32.totalorder %s16, 0
      %p69 = por %p67, %p68
      %p70 = scmp.ne.s32.totalorder %s62, %s64
      %p71 = scmp.eq.s32.totalorder %s21, 7
      %p72 = por %p70, %p71
      %p73 = scmp.ne.s32.totalorder %s64, %s65
      %p74 = scmp.eq.s32.totalorder %s21, 0
      %p75 = por %p73, %p74
      %p76 = scmp.ne.s32.totalorder %s64, %s65
      %p77 = scmp.eq.s32.totalorder %s22, 7
      %p78 = por %p76, %p77
      %p80 = scmp.ne.s32.totalorder %s65, %s79
      %p81 = scmp.eq.s32.totalorder %s22, 0
      %p82 = por %p80, %p81
      %s84 = sadd.s32 %s83, 1
      %p87 = scmp.eq.s32.totalorder %s16, 7
      %p88 = scmp.ne.s32.totalorder %s83, %s85
      %p89 = scmp.eq.s32.totalorder %s16, 0
      %p90 = por %p88, %p89
      %p91 = scmp.ne.s32.totalorder %s83, %s85
      %p92 = scmp.eq.s32.totalorder %s21, 7
      %p93 = por %p91, %p92
      %p94 = scmp.ne.s32.totalorder %s85, %s86
      %p95 = scmp.eq.s32.totalorder %s21, 0
      %p96 = por %p94, %p95
      %p97 = scmp.ne.s32.totalorder %s85, %s86
      %p98 = scmp.eq.s32.totalorder %s22, 7
      %p99 = por %p97, %p98
      %p101 = scmp.ne.s32.totalorder %s86, %s100
      %p102 = scmp.eq.s32.totalorder %s22, 0
      %p103 = por %p101, %p102
      %s104 = ssub.s32 %s23, %s35
      %s105 = ssub.s32 %s24, %s31
      %s106 = sor.u32 %s104, %s105
      %p107 = scmp.eq.s32.totalorder %s106, 0
      %s109 = sadd.s32 %s108, 1
      %s110 = scalar_select %p107, %s108, %s109
      %p113 = pneg %p107
      %p114 = scmp.eq.s32.totalorder %s16, 7
      %p115 = por %p113, %p114
      %p116 = scmp.ne.s32.totalorder %s108, %s111
      %p117 = scmp.eq.s32.totalorder %s16, 0
      %p118 = por %p116, %p117
      %p119 = scmp.ne.s32.totalorder %s108, %s111
      %p120 = scmp.eq.s32.totalorder %s21, 7
      %p121 = por %p119, %p120
      %p122 = scmp.ne.s32.totalorder %s111, %s112
      %p123 = scmp.eq.s32.totalorder %s21, 0
      %p124 = por %p122, %p123
      %p125 = scmp.ne.s32.totalorder %s111, %s112
      %p126 = scmp.eq.s32.totalorder %s22, 7
      %p127 = por %p125, %p126
      %p129 = scmp.ne.s32.totalorder %s112, %s128
      %p130 = scmp.eq.s32.totalorder %s22, 0
      %p131 = por %p129, %p130
      %p132 = scmp.le.s32.totalorder 1, %s16
      %p133 = scmp.lt.s32.totalorder %s16, 9
      %p134 = pnand %p132, %p133
      %p135 = pneg %p134
      // Predicated region
      $region9: #{tpu_custom_call.1} parent=5 // pred_check
        _
      $region10: #{tpu_custom_call.1} parent=5 // pred_check_branch
        %137 = sbr.rel (%p134) target = $region12
      $region11: #{tpu_custom_call.1} parent=5 // pred_region
        %s138 = ssub.s32 %s16, 1
        // Predicated region
        $region13: #{tpu_custom_call.1} parent=11 // pred_check
          %p139 = pneg %p75
        $region14: #{tpu_custom_call.1} parent=11 // pred_check_branch
          %141 = sbr.rel (%p139) target = $region16
        $region15: #{tpu_custom_call.1} parent=11 // pred_region
          %143 = vsyncadd [#allocation6], 0
          %s144 = sshll.u32 %s1, 4
          %s145 = int_to_ptr.hbm [resolvable:$true] %s144
          %s146 = sshll.u32 [#allocation5], 4
          %s147 = int_to_ptr.vmem [resolvable:$true] %s146
          %152 = dma.hbm_to_vmem [thread:$0]  %s145, 256, %s147, [#allocation6], 64, 64, 4
        $region16: #{tpu_custom_call.1} parent=11 // pred_fallthru
          _
        // Predicated region
        $region17: #{tpu_custom_call.1} parent=11 // pred_check
          %p153 = pneg %p96
        $region18: #{tpu_custom_call.1} parent=11 // pred_check_branch
          %155 = sbr.rel (%p153) target = $region20
        $region19: #{tpu_custom_call.1} parent=11 // pred_region
          _
        $region20: #{tpu_custom_call.1} parent=11 // pred_fallthru
          _
      $region12: #{tpu_custom_call.1} parent=5 // pred_fallthru
        _
      %p156 = scmp.lt.s32.totalorder %s16, 8
      // Predicated region
      $region21: #{tpu_custom_call.1} parent=5 // pred_check
        %p157 = pneg %p156
      $region22: #{tpu_custom_call.1} parent=5 // pred_check_branch
        %159 = sbr.rel (%p157) target = $region24
      $region23: #{tpu_custom_call.1} parent=5 // pred_region
        // Predicated region
        $region25: #{tpu_custom_call.1} parent=23 // pred_check
          %p160 = pneg %p48
        $region26: #{tpu_custom_call.1} parent=23 // pred_check_branch
          %162 = sbr.rel (%p160) target = $region28
        $region27: #{tpu_custom_call.1} parent=23 // pred_region
          %s163 = sand.u32 %s38, 1
          %s164 = scalar_lea.sflag [#allocation3], %s163
          %s165 = sand.u32 %s38, 1
          %s166 = smul.addr %s165, 128
          %s167 = scalar_lea.vmem [#allocation2], %s166
          %169 = vsyncadd %s164, 0
          %s170 = smul.addr %s23, 32
          %s171 = smul.addr %s170, 4
          %s172 = scalar_lea.hbm %s0, %s171
          %s173 = sshll.u32 %s172, 4
          %s174 = int_to_ptr.hbm [resolvable:$true] %s173
          %s175 = sshll.u32 %s167, 4
          %s176 = int_to_ptr.vmem [resolvable:$true] %s175
          %181 = dma.hbm_to_vmem [thread:$0]  %s174, 2048, %s176, %s164, 64, 64, 4
        $region28: #{tpu_custom_call.1} parent=23 // pred_fallthru
          _
      $region24: #{tpu_custom_call.1} parent=5 // pred_fallthru
        _
      %p182 = scmp.le.s32.totalorder 1, %s16
      %p183 = scmp.lt.s32.totalorder %s16, 9
      %p184 = pnand %p182, %p183
      %p185 = pneg %p184
      // Predicated region
      $region29: #{tpu_custom_call.1} parent=5 // pred_check
        _
      $region30: #{tpu_custom_call.1} parent=5 // pred_check_branch
        %187 = sbr.rel (%p184) target = $region32
      $region31: #{tpu_custom_call.1} parent=5 // pred_region
        %s188 = ssub.s32 %s16, 1
        %s189 = sand.u32 %s41, 1
        %s190 = scalar_lea.sflag [#allocation3], %s189
        %s191 = sand.u32 %s41, 1
        %s192 = smul.addr %s191, 128
        %s193 = scalar_lea.vmem [#allocation2], %s192
        // Predicated region
        $region33: #{tpu_custom_call.1} parent=31 // pred_check
          %p194 = pneg %p54
        $region34: #{tpu_custom_call.1} parent=31 // pred_check_branch
          %196 = sbr.rel (%p194) target = $region36
        $region35: #{tpu_custom_call.1} parent=31 // pred_region
          %198 = dma.done %s190, 2048
        $region36: #{tpu_custom_call.1} parent=31 // pred_fallthru
          _
        // Predicated region
        $region37: #{tpu_custom_call.1} parent=31 // pred_check
          %p199 = pneg %p75
        $region38: #{tpu_custom_call.1} parent=31 // pred_check_branch
          %201 = sbr.rel (%p199) target = $region40
        $region39: #{tpu_custom_call.1} parent=31 // pred_region
          %203 = dma.done [#allocation6], 256
        $region40: #{tpu_custom_call.1} parent=31 // pred_fallthru
          _
        %s204 = sand.u32 %s41, 1
        %s205 = scalar_lea.sflag [#allocation3], %s204
        %s206 = sand.u32 %s41, 1
        %s207 = smul.addr %s206, 128
        %s208 = scalar_lea.vmem [#allocation2], %s207
        %p209 = pneg %p54
        %p210 = pneg %p51
        %p211 = pneg %p75
        %p212 = pneg %p72
        %p213 = pneg %p96
        %p214 = pneg %p93
        %p215 = pneg %p124
        %p216 = pneg %p121
        %s217 = sand.u32 %s111, 1
        %s218 = scalar_lea.sflag [#allocation4], %s217
        %s219 = sand.u32 %s111, 1
        %s220 = smul.addr %s219, 32
        %s221 = scalar_lea.vmem [#allocation7], %s220
        %s222 = smul.u32 8, %s26
        %s224 = smul.u32 %s26, 4
        %s225 = smul.u32 %s224, 2
        %s226 = smul.addr %s225, 4
        %s227 = scalar_lea.vmem %s193, %s226 [#allocation2]
        %v228 = vld [vmem:[%s227] sm:$0xf]
        %v229 = vld [vmem:[%s227 + $0x4] sm:$0xf]
        %v230 = vld [vmem:[%s227 + $0x8] sm:$0xf]
        %v231 = vld [vmem:[%s227 + $0xc] sm:$0xf]
        %v232 = vld [vmem:[%s227 + $0x10] sm:$0xf]
        %v233 = vld [vmem:[%s227 + $0x14] sm:$0xf]
        %v234 = vld [vmem:[%s227 + $0x18] sm:$0xf]
        %v235 = vld [vmem:[%s227 + $0x1c] sm:$0xf]
        %v236 = vld [vmem:[#allocation5] sm:$0xf]
        %v237 = vld [vmem:[#allocation5 + $0x4] sm:$0xf]
        %v238 = vld [vmem:[#allocation5 + $0x8] sm:$0xf]
        %v239 = vld [vmem:[#allocation5 + $0xc] sm:$0x3]
        %v240 = vld [vmem:[%s2] sm:$0x1]
        %v242 = vperm.slane %v240, 0
        %v252 = vunpack.c.l.b16 %v228
        %v253 = vunpack.c.l.b16 %v229
        %v254 = vunpack.c.l.b16 %v230
        %v255 = vunpack.c.l.b16 %v231
        %v256 = vunpack.c.l.b16 %v232
        %v257 = vunpack.c.l.b16 %v233
        %v258 = vunpack.c.l.b16 %v234
        %v259 = vunpack.c.l.b16 %v235
        %v260 = vpack.c.b16 %v253, %v252
        %v261 = vpack.c.b16 %v255, %v254
        %v262 = vpack.c.b16 %v257, %v256
        %v263 = vpack.c.b16 %v259, %v258
        %v268 = vunpack.c.l.b16 %v236
        %v269 = vunpack.c.l.b16 %v237
        %v270 = vunpack.c.l.b16 %v238
        %v271 = vunpack.c.l.b16 %v239
        %v272 = vpack.c.b16 %v269, %v268
        %v273 = vpack.c.b16 %v271, %v270
        %vm275 = vcmask 220160
        %v277 = vsel %vm275, %v260, 0
        %v280 = vsel %vm275, %v261, 0
        %v283 = vsel %vm275, %v262, 0
        %v286 = vsel %vm275, %v263, 0
        %vm288 = vcmask 1044480
        %vm289 = vcmask 1045504
        %v290 = vsel %vm288, 4294967295, 65535
        %v291 = vsel %vm289, %v290, 0
        %v293 = vand.u32 %v273, %v291
        %295 = vmatpush.bf16.msra.mxu0 0
        %296 = vmatpush.bf16.msra.mxu0 0
        %297 = vmatpush.bf16.msra.mxu0 0
        %298 = vmatpush.bf16.msra.mxu0 0
        %299 = vmatpush.bf16.msra.mxu0 0
        %300 = vmatpush.bf16.msra.mxu0 0
        %301 = vmatpush.bf16.msra.mxu0 %v293
        %302 = vmatpush.bf16.msra.mxu0 %v272
        %303 = vmatmul.bf16.gmra.mxu0 %v277
        %v304 = vpop.f32.mrf.mxu0
        %v305 = vadd.f32 %v242, %v304
        %v306 = vpop.f32.mrf.mxu0
        %v307 = vadd.f32 %v242, %v306
        %308 = vmatmul.bf16.gmra.mxu0 %v280
        %v309 = vpop.f32.mrf.mxu0
        %v310 = vadd.f32 %v242, %v309
        %v311 = vpop.f32.mrf.mxu0
        %v312 = vadd.f32 %v242, %v311
        %313 = vmatmul.bf16.gmra.mxu0 %v283
        %v314 = vpop.f32.mrf.mxu0
        %v315 = vadd.f32 %v242, %v314
        %v316 = vpop.f32.mrf.mxu0
        %v317 = vadd.f32 %v242, %v316
        %318 = vmatmul.bf16.gmra.mxu0 %v286
        %v319 = vpop.f32.mrf.mxu0
        %v320 = vadd.f32 %v242, %v319
        %v321 = vpop.f32.mrf.mxu0
        %v322 = vadd.f32 %v242, %v321
        %323 = vdwg.mxu0
        %v324 = vmax.f32 %v305, 0.0
        %v325 = vmax.f32 %v307, 0.0
        %v326 = vmax.f32 %v310, 0.0
        %v327 = vmax.f32 %v312, 0.0
        %v328 = vmax.f32 %v315, 0.0
        %v329 = vmax.f32 %v317, 0.0
        %v330 = vmax.f32 %v320, 0.0
        %v331 = vmax.f32 %v322, 0.0
        %v332 = vpack.c.bf16 %v324, %v324
        %v333 = vpack.c.bf16 %v325, %v325
        %v334 = vpack.c.bf16 %v326, %v326
        %v335 = vpack.c.bf16 %v327, %v327
        %v336 = vpack.c.bf16 %v328, %v328
        %v337 = vpack.c.bf16 %v329, %v329
        %v338 = vpack.c.bf16 %v330, %v330
        %v339 = vpack.c.bf16 %v331, %v331
        %340 = vst [vmem:[%s221] sm:$0xf] %v332
        %341 = vst [vmem:[%s221 + $0x4] sm:$0xf] %v333
        %342 = vst [vmem:[%s221 + $0x8] sm:$0xf] %v334
        %343 = vst [vmem:[%s221 + $0xc] sm:$0xf] %v335
        %344 = vst [vmem:[%s221 + $0x10] sm:$0xf] %v336
        %345 = vst [vmem:[%s221 + $0x14] sm:$0xf] %v337
        %346 = vst [vmem:[%s221 + $0x18] sm:$0xf] %v338
        %347 = vst [vmem:[%s221 + $0x1c] sm:$0xf] %v339
        %s348 = sand.u32 %s111, 1
        %s349 = scalar_lea.sflag [#allocation4], %s348
        %s350 = sand.u32 %s111, 1
        %s351 = smul.addr %s350, 32
        %s352 = scalar_lea.vmem [#allocation7], %s351
        // Predicated region
        $region41: #{tpu_custom_call.1} parent=31 // pred_check
          %p353 = pneg %p121
        $region42: #{tpu_custom_call.1} parent=31 // pred_check_branch
          %355 = sbr.rel (%p353) target = $region44
        $region43: #{tpu_custom_call.1} parent=31 // pred_region
          %s356 = smul.u32 8, %s26
          %358 = vsyncadd %s349, 0
          %s359 = smul.addr %s25, 32
          %s360 = sadd.s32 %s356, %s359
          %s361 = smul.addr %s360, 4
          %s362 = scalar_lea.hbm %s3, %s361
          %s363 = sshll.u32 %s352, 4
          %s364 = int_to_ptr.vmem [resolvable:$true] %s363
          %s365 = sshll.u32 %s362, 4
          %s366 = int_to_ptr.hbm [resolvable:$true] %s365
          %371 = dma.vmem_to_hbm [thread:$0]  %s364, 512, %s366, %s349, 64, 64, 4
        $region44: #{tpu_custom_call.1} parent=31 // pred_fallthru
          _
      $region32: #{tpu_custom_call.1} parent=5 // pred_fallthru
        _
      %p372 = scmp.le.s32.totalorder 2, %s16
      // Predicated region
      $region45: #{tpu_custom_call.1} parent=5 // pred_check
        %p373 = pneg %p372
      $region46: #{tpu_custom_call.1} parent=5 // pred_check_branch
        %375 = sbr.rel (%p373) target = $region48
      $region47: #{tpu_custom_call.1} parent=5 // pred_region
        %s376 = ssub.s32 %s16, 2
        // Predicated region
        $region49: #{tpu_custom_call.1} parent=47 // pred_check
          %p377 = pneg %p127
        $region50: #{tpu_custom_call.1} parent=47 // pred_check_branch
          %379 = sbr.rel (%p377) target = $region52
        $region51: #{tpu_custom_call.1} parent=47 // pred_region
          %s380 = sand.u32 %s112, 1
          %s381 = scalar_lea.sflag [#allocation4], %s380
          %s382 = sand.u32 %s112, 1
          %s383 = smul.addr %s382, 32
          %s384 = scalar_lea.vmem [#allocation7], %s383
          %386 = dma.done %s381, 512
        $region52: #{tpu_custom_call.1} parent=47 // pred_fallthru
          _
      $region48: #{tpu_custom_call.1} parent=5 // pred_fallthru
        _
    $region6: #{tpu_custom_call.1} parent=1 // loop_footer
      %s20 = sadd.s32 1, %s16
    $region7: #{tpu_custom_call.1} parent=1 // loop_footer_branch
      %15 = sbr.rel target = $region3
    $region8: #{tpu_custom_call.1} parent=1 // loop_exit
      _
    %387 = vsyncpa [#allocation3], 1
    %s388 = scalar_lea.sflag [#allocation3], 1
    %389 = vsyncpa %s388, 1
    %390 = vsyncpa [#allocation6], 1
    %391 = vsyncpa [#allocation4], 1
    %s392 = scalar_lea.sflag [#allocation4], 1
    %393 = vsyncpa %s392, 1

</llo_original>
